<compile_context>
chip_gen: v5e
topology: v5e:2x2
jax: 0.10.0
libtpu: 0.0.40
codegen_flags: <defaults>
</compile_context>

<pallas_src>
import math
import functools

import jax
import jax.numpy as jnp
from jax.experimental import pallas as pl
from jax.experimental.pallas import tpu as pltpu


# ---------------------------------------------------------------------------
# parameter construction (mirrors FloatEncoder.__init__ with PositionalEncoder
# defaults: min_wavelength=1.0, max_wavelength=100000.0)
# ---------------------------------------------------------------------------
def make_positional_encoder_terms(d_model, min_wavelength=1.0, max_wavelength=100000.0):
    # NOTE: mirrors upstream exactly; d_model <= 3 gives d_sin==1 or d_cos==1 and a
    # divide-by-zero, same as the PyTorch code.
    d_sin = math.ceil(d_model / 2)
    d_cos = d_model - d_sin
    base = min_wavelength / (2 * math.pi)
    scale = max_wavelength / min_wavelength
    sin_exp = jnp.arange(0, d_sin, dtype=jnp.float32) / (d_sin - 1)
    cos_exp = (jnp.arange(d_sin, d_model, dtype=jnp.float32) - d_sin) / (d_cos - 1)
    sin_term = (base * scale ** sin_exp).astype(jnp.float32)
    cos_term = (base * scale ** cos_exp).astype(jnp.float32)
    return sin_term, cos_term


# ---------------------------------------------------------------------------
# Pallas kernel: pure streaming add (PE is precomputed, position-only)
# ---------------------------------------------------------------------------
def _add_pe_kernel(x_ref, pe_ref, o_ref):
    # x_ref / o_ref: (tile_b, tile_rows, W)   pe_ref: (tile_rows, W)
    # pe's block index depends only on the OUTER grid axis, so its VMEM tile is
    # resident (no re-DMA) across the whole inner (batch) sweep.
    o_ref[...] = x_ref[...] + pe_ref[...][None, :, :]


def _round_up(x, m):
    return ((x + m - 1) // m) * m


@functools.partial(jax.jit, static_argnames=("block_bytes",))
def positional_encoder_pallas(x, sin_term, cos_term, block_bytes=None):
    """x: (B, N, d_model) -> x + sinusoidal positional encoding (same dtype as x)."""
    B, N, D = x.shape
    assert sin_term.shape[0] + cos_term.shape[0] == D
    orig_dtype = x.dtype
    xf = x.astype(jnp.float32)

    # ---- lane-dense layout: kernel lane width W is always a multiple of 128 ----
    if D % 128 == 0:
        rpb, d_pad, n_pad = 1, D, N
    elif D < 128 and 128 % D == 0:
        rpb = 128 // D          # pack rpb consecutive positions into one lane row
        d_pad = D
        n_pad = _round_up(N, rpb)
    else:
        rpb = 1
        d_pad = _round_up(D, 128)
        n_pad = N

    # ---- positional-encoding slab, computed ONCE (O(N*D); same math as torch) ----
    pos = jnp.arange(n_pad, dtype=jnp.float32)
    pe = jnp.concatenate(
        [jnp.sin(pos[:, None] / sin_term[None, :].astype(jnp.float32)),
         jnp.cos(pos[:, None] / cos_term[None, :].astype(jnp.float32))],
        axis=-1)                                           # (n_pad, D)

    if d_pad != D:
        xf = jnp.pad(xf, ((0, 0), (0, 0), (0, d_pad - D)))
        pe = jnp.pad(pe, ((0, 0), (0, d_pad - D)))
    if n_pad != N:
        xf = jnp.pad(xf, ((0, 0), (0, n_pad - N), (0, 0)))

    W = rpb * d_pad
    rows_per_batch = n_pad // rpb
    x3 = xf.reshape(B, rows_per_batch, W)                  # lane-dense view (free reshape)
    pe2 = pe.reshape(rows_per_batch, W)

    # ---- generation-aware tile sizing (v7x has 64 MiB VMEM; v5e/v6e 128 MiB) ----
    try:
        vmem_cap = int(pltpu.get_tpu_info().vmem_capacity_bytes)
    except Exception:
        vmem_cap = 128 * 1024 * 1024
    if block_bytes is None:
        block_bytes = int(min(max(vmem_cap // 16, 512 * 1024), 8 * 1024 * 1024))
    vmem_limit = int(min(vmem_cap * 3 // 4, 96 * 1024 * 1024))

    bytes_per_row = W * 4
    budget_rows = max(8, block_bytes // bytes_per_row)
    if rows_per_batch <= budget_rows:
        # whole sequence fits one block -> tile over batch to keep blocks big
        tile_rows = rows_per_batch                         # full dim: always legal
        tile_b = max(1, min(B, budget_rows // max(rows_per_batch, 1)))
    else:
        tile_rows = (budget_rows // 8) * 8                 # 8-aligned sublane tiling
        tile_b = 1

    grid = (pl.cdiv(rows_per_batch, tile_rows), pl.cdiv(B, tile_b))

    out = pl.pallas_call(
        _add_pe_kernel,
        out_shape=jax.ShapeDtypeStruct((B, rows_per_batch, W), jnp.float32),
        grid_spec=pltpu.PrefetchScalarGridSpec(
            num_scalar_prefetch=0,
            grid=grid,                                     # (row blocks, batch blocks)
            in_specs=[
                pl.BlockSpec((tile_b, tile_rows, W), lambda j, b: (b, j, 0)),
                pl.BlockSpec((tile_rows, W), lambda j, b: (j, 0)),   # batch-invariant
            ],
            out_specs=pl.BlockSpec((tile_b, tile_rows, W), lambda j, b: (b, j, 0)),
        ),
        compiler_params=pltpu.CompilerParams(
            dimension_semantics=("parallel", "parallel"),
            vmem_limit_bytes=vmem_limit),
        cost_estimate=pl.CostEstimate(
            flops=int(B * rows_per_batch * W),
            transcendentals=0,
            bytes_accessed=int((2 * B + 1) * rows_per_batch * W * 4)),
    )(x3, pe2)

    out = out.reshape(B, n_pad, d_pad)
    if n_pad != N:
        out = out[:, :N, :]
    if d_pad != D:
        out = out[..., :D]
    return out.astype(orig_dtype)


# ---------------------------------------------------------------------------
# pure-JAX reference (mirrors the PyTorch forward exactly: divide + sin/cos)
# ---------------------------------------------------------------------------
def positional_encoder_ref(x, sin_term, cos_term):
    B, N, D = x.shape
    pos = jnp.arange(N, dtype=jnp.float32)
    sin_pos = jnp.sin(pos[:, None] / sin_term[None, :])
    cos_pos = jnp.cos(pos[:, None] / cos_term[None, :])
    enc = jnp.concatenate([sin_pos, cos_pos], axis=-1)     # (N, D)
    return x + enc[None, :, :]


if __name__ == "__main__":
    key = jax.random.PRNGKey(0)

    def check(seed, B, N, D, block_bytes=None):
        st, ct = make_positional_encoder_terms(D)
        xx = jax.random.normal(jax.random.fold_in(key, seed), (B, N, D), dtype=jnp.float32)
        out = jax.block_until_ready(
            positional_encoder_pallas(xx, st, ct, block_bytes=block_bytes))
        ref = positional_encoder_ref(xx, st, ct)
        assert out.shape == (B, N, D)
        assert jnp.allclose(out, ref, atol=1e-5, rtol=1e-5), \
            f"mismatch vs reference (B={B}, N={N}, D={D})"

    # small demo shape: batch=2, seq=8, hidden=32 (4 positions packed per lane row)
    check(0, 2, 8, 32)
    # multi row-block path + PE residency across the batch axis (small block budget)
    check(1, 2, 512, 32, block_bytes=16 * 1024)
    # awkward hidden size -> zero-pad feature dim up to lane width 128
    check(2, 2, 16, 48)
    # seq length not divisible by positions-per-row -> pad N, slice back
    check(3, 2, 7, 32)

    print("KERNEL_OK")
</pallas_src>

<mosaic_0001>
module attributes {stable_mosaic.version = 11 : i64} {
  func.func @_add_pe_kernel(%arg0: i32, %arg1: i32, %arg2: memref<2x2x128xf32, #tpu.memory_space<vmem>>, %arg3: memref<2x128xf32, #tpu.memory_space<vmem>>, %arg4: memref<2x2x128xf32, #tpu.memory_space<vmem>>) attributes {dimension_semantics = [#tpu.dimension_semantics<parallel>, #tpu.dimension_semantics<parallel>], iteration_bounds = array<i64: 1, 1>, scalar_prefetch = 0 : i64, scratch_operands = 0 : i64, tpu.core_type = #tpu.core_type<tc>, window_params = [{transform_indices = @transform_0, window_bounds = array<i64: 2, 2, 128>}, {transform_indices = @transform_1, window_bounds = array<i64: 2, 128>}, {transform_indices = @transform_2, window_bounds = array<i64: 2, 2, 128>}]} {
    %c0 = arith.constant 0 : index
    %c0_0 = arith.constant 0 : index
    %c0_1 = arith.constant 0 : index
    %0 = vector.load %arg2[%c0, %c0_0, %c0_1] : memref<2x2x128xf32, #tpu.memory_space<vmem>>, vector<2x2x128xf32>
    %c0_2 = arith.constant 0 : index
    %c0_3 = arith.constant 0 : index
    %1 = vector.load %arg3[%c0_2, %c0_3] : memref<2x128xf32, #tpu.memory_space<vmem>>, vector<2x128xf32>
    %2 = vector.shape_cast %1 : vector<2x128xf32> to vector<1x2x128xf32>
    %3 = vector.broadcast %2 : vector<1x2x128xf32> to vector<2x2x128xf32>
    %4 = arith.addf %0, %3 : vector<2x2x128xf32>
    %c0_4 = arith.constant 0 : index
    %c0_5 = arith.constant 0 : index
    %c0_6 = arith.constant 0 : index
    %5 = vector.load %arg4[%c0_4, %c0_5, %c0_6] : memref<2x2x128xf32, #tpu.memory_space<vmem>>, vector<2x2x128xf32>
    tpu.vector_store %arg4[%c0_4, %c0_5, %c0_6], %4 {strides = array<i32>} : memref<2x2x128xf32, #tpu.memory_space<vmem>>, vector<2x2x128xf32>,
    return
  }
  func.func @transform_0(%arg0: i32, %arg1: i32) -> (i32, i32, i32) {
    %c0_i32 = arith.constant 0 : i32
    %c0_i32_0 = arith.constant 0 : i32
    return %arg1, %arg0, %c0_i32 : i32, i32, i32
  }
  func.func @transform_1(%arg0: i32, %arg1: i32) -> (i32, i32) {
    %c0_i32 = arith.constant 0 : i32
    %c0_i32_0 = arith.constant 0 : i32
    return %arg0, %c0_i32 : i32, i32
  }
  func.func @transform_2(%arg0: i32, %arg1: i32) -> (i32, i32, i32) {
    %c0_i32 = arith.constant 0 : i32
    %c0_i32_0 = arith.constant 0 : i32
    return %arg1, %arg0, %c0_i32 : i32, i32, i32
  }
}

</mosaic_0001>

<llo_original>
// kernel: positional_encoder_pallas.1
$region0: #{positional_encoder_pallas.1}
  #allocation0 [shape = 'u32[]', space=smem, size = 0x4, offset = 0x4, fixed_abs, tag = 'smem constant byte address 0x4 - core index']
  #allocation1 [shape = 'u32[72,128]{1,0:T(1,128)}', space=vmem, size = 0x9000, scoped, tag = 'internal scratch']
  %s0 = inlined_call_operand.vmem [shape: f32[2,2,128], index: 0, kind: input, shape index: {}]
  %s1 = inlined_call_operand.vmem [shape: f32[2,128], index: 1, kind: input, shape index: {}]
  %s2 = inlined_call_operand.vmem [shape: f32[2,2,128], index: 2, kind: output, shape index: {}]
  %s3 = sld [smem:[#allocation0]]
  $region18: #{positional_encoder_pallas.1} parent=0
    _
  %s5 = ssub.s32 1, %s3
  %s6 = scalar_select 0, %s5, %s3
  // Predicated region
  $region2: #{positional_encoder_pallas.1} parent=0 // pred_check
    _
  $region3: #{positional_encoder_pallas.1} parent=0 // pred_check_branch
    %8 = sbr.rel (0) target = $region5
  $region4: #{positional_encoder_pallas.1} parent=0 // pred_region
    _
  $region5: #{positional_encoder_pallas.1} parent=0 // pred_fallthru
    _
  // Predicated region
  $region6: #{positional_encoder_pallas.1} parent=0 // pred_check
    _
  $region7: #{positional_encoder_pallas.1} parent=0 // pred_check_branch
    %10 = sbr.rel (0) target = $region9
  $region8: #{positional_encoder_pallas.1} parent=0 // pred_region
    _
  $region9: #{positional_encoder_pallas.1} parent=0 // pred_fallthru
    _
  %v11 = vld [vmem:[%s0] sm:$0x3]
  %v12 = vld [vmem:[%s0 + $0x2] sm:$0x3]
  %v13 = vld [vmem:[%s1] sm:$0x3]
  %v14 = vadd.f32 %v11, %v13
  %v15 = vadd.f32 %v12, %v13
  %16 = vst [vmem:[%s2] sm:$0x3] %v14
  %17 = vst [vmem:[%s2 + $0x2] sm:$0x3] %v15
  // Predicated region
  $region10: #{positional_encoder_pallas.1} parent=0 // pred_check
    _
  $region11: #{positional_encoder_pallas.1} parent=0 // pred_check_branch
    %19 = sbr.rel (0) target = $region13
  $region12: #{positional_encoder_pallas.1} parent=0 // pred_region
    _
  $region13: #{positional_encoder_pallas.1} parent=0 // pred_fallthru
    _
  // Predicated region
  $region14: #{positional_encoder_pallas.1} parent=0 // pred_check
    _
  $region15: #{positional_encoder_pallas.1} parent=0 // pred_check_branch
    %21 = sbr.rel (0) target = $region17
  $region16: #{positional_encoder_pallas.1} parent=0 // pred_region
    _
  $region17: #{positional_encoder_pallas.1} parent=0 // pred_fallthru
    _

</llo_original>
